<compile_context>
chip_gen: v7x
topology: tpu7x:2x2x1
jax: 0.10.0
libtpu: 0.0.40
codegen_flags: <defaults>
</compile_context>

<pallas_src>
import jax
import jax.numpy as jnp
from jax.experimental import pallas as pl
from jax.experimental.pallas import tpu as pltpu

_LANES = 128
_SUBLANES = 8
_BLOCK_BYTES = 4 * 1024 * 1024        # HBM bytes per input per pipeline buffer
_VMEM_LIMIT = 48 * 1024 * 1024        # safe on v5e/v6e (128 MiB) and v7x (64 MiB)
_MAX_UNROLL = 32


def _num_tensorcores() -> int:
    """Best-effort TensorCore count; defaults to 1 (always correct)."""
    try:
        info = pltpu.get_tpu_info()
        for name in ("num_cores", "core_count", "num_tensorcores",
                     "tensorcores_per_chip", "cores_per_chip"):
            v = getattr(info, name, None)
            if isinstance(v, int) and v > 0:
                return v
    except Exception:
        pass
    try:
        kind = (getattr(jax.devices()[0], "device_kind", "") or "").lower()
        # Megacore / dual-TensorCore parts benefit from a 2-way parallel split.
        if any(t in kind for t in ("v4", "v5p", "v7")):
            return 2
    except Exception:
        pass
    return 1


def _make_kernel(rows_valid, tiles_per_group, chunk, n_chunks, needs_mask, unroll):
    """Kernel: accumulate sum((a-b)^2) of one (tm, L) tile into an (8, L) block."""

    def kernel(a_ref, b_ref, o_ref):
        g = pl.program_id(0)
        i = pl.program_id(1)          # inner (reduction) axis

        @pl.when(i == 0)
        def _():
            o_ref[...] = jnp.zeros_like(o_ref)

        tm, lanes = a_ref.shape
        # Logical (unclamped) tile index -> global row offset of this block.
        row0 = (g * tiles_per_group + i) * tm

        def one_chunk(c, acc):
            start = pl.multiple_of(c * chunk, chunk)
            a = a_ref[pl.ds(start, chunk), :].astype(jnp.float32)
            b = b_ref[pl.ds(start, chunk), :].astype(jnp.float32)
            d = a - b
            if needs_mask:
                rid = jax.lax.broadcasted_iota(jnp.int32, (chunk, 1), 0) + (row0 + start)
                d = jnp.where(rid < rows_valid, d, 0.0)
            sq = d * d                # real inputs: |x|^2 == x * x
            # Fold whole (8, lanes) vreg groups with plain VPU adds (no XLU).
            return acc + jnp.sum(sq.reshape(chunk // _SUBLANES, _SUBLANES, lanes), axis=0)

        acc0 = jnp.zeros((_SUBLANES, lanes), jnp.float32)
        acc = jax.lax.fori_loop(0, n_chunks, one_chunk, acc0, unroll=unroll)
        o_ref[...] += acc

    return kernel


def frobenius_loss(a: jax.Array, b: jax.Array) -> jax.Array:
    """Pallas implementation of FrobeniusLoss.forward for (B, M, N) inputs."""
    assert a.shape == b.shape and a.ndim == 3, "expected matching (B, M, N) inputs"
    assert not (jnp.issubdtype(a.dtype, jnp.complexfloating)
                or jnp.issubdtype(b.dtype, jnp.complexfloating)), \
        "complex inputs not supported (|x|^2 would need conj)"

    B, M, N = a.shape
    total = a.size

    isz_a = jnp.dtype(a.dtype).itemsize
    isz_b = jnp.dtype(b.dtype).itemsize
    isz = max(isz_a, isz_b)                               # byte budget driver
    gran = max(_SUBLANES, 32 // max(1, min(isz_a, isz_b)))  # 8/16/32 sublane packing

    # Free (copy-less) 2D lane-dense view of the flattened data.
    if total % _LANES == 0:
        L = _LANES
    else:
        L = N                     # natural row layout; lane dim == full last dim
    R = total // L
    a2 = a.reshape(R, L)
    b2 = b.reshape(R, L)

    # Tiny inputs only: round rows up to one packing granule (negligible copy).
    if R < gran:
        pad = gran - R
        a2 = jnp.pad(a2, ((0, pad), (0, 0)))
        b2 = jnp.pad(b2, ((0, pad), (0, 0)))
        R = gran

    # Row-tile size: ~_BLOCK_BYTES per input per buffer, dtype-scaled.
    Lp = -(-L // _LANES) * _LANES                         # lane-padded VMEM width
    tm_raw = max(1, min(_BLOCK_BYTES // (Lp * isz), R))
    tm, chunk = gran, gran
    for c in (512, 256, 128, 64, 32, 16, 8):
        if c >= gran and tm_raw >= c:
            tm = (tm_raw // c) * c
            chunk = c
            break
    n_chunks = tm // chunk
    unroll = n_chunks <= _MAX_UNROLL

    tiles = -(-R // tm)

    grp = min(_num_tensorcores(), 2)
    if grp < 2 or tiles < 4 * grp:
        grp = 1
    tpg = -(-tiles // grp)

    # Mask only when the last tile is ragged or the grid has clamped duplicates.
    needs_mask = (tiles * tm != R) or (grp * tpg != tiles)

    in_map = lambda g, i: (jnp.minimum(g * tpg + i, tiles - 1), 0)

    kernel = _make_kernel(R, tpg, chunk, n_chunks, needs_mask, unroll)

    partial = pl.pallas_call(
        kernel,
        out_shape=jax.ShapeDtypeStruct((grp * _SUBLANES, L), jnp.float32),
        grid_spec=pltpu.PrefetchScalarGridSpec(
            num_scalar_prefetch=0,
            grid=(grp, tpg),
            in_specs=[
                pl.BlockSpec((tm, L), in_map),
                pl.BlockSpec((tm, L), in_map),
            ],
            out_specs=pl.BlockSpec((_SUBLANES, L), lambda g, i: (g, 0)),
        ),
        compiler_params=pltpu.CompilerParams(
            dimension_semantics=("parallel", "arbitrary"),
            vmem_limit_bytes=_VMEM_LIMIT,
        ),
    )(a2, b2)

    # Final cross-lane reduction + mean over the batch, done once in XLA.
    return jnp.sum(partial) / jnp.float32(B)


if __name__ == "__main__":
    key = jax.random.PRNGKey(0)

    # Small shape consistent with the module's (batch, dim1, dim2) inputs.
    B, M, N = 2, 16, 16
    ka, kb = jax.random.split(key)
    a = jax.random.normal(ka, (B, M, N), dtype=jnp.float32)
    b = jax.random.normal(kb, (B, M, N), dtype=jnp.float32)

    loss = frobenius_loss(a, b)
    jax.block_until_ready(loss)
    ref = jnp.mean(jnp.sum(jnp.abs(a - b) ** 2, axis=(1, 2)))
    assert jnp.allclose(loss, ref, rtol=1e-5, atol=1e-5), (loss, ref)

    # Exercise the ragged / non-128-aligned path (no bulk padding, in-kernel mask).
    B2, M2, N2 = 3, 33, 17
    kc, kd = jax.random.split(kb)
    c = jax.random.normal(kc, (B2, M2, N2), dtype=jnp.float32)
    d = jax.random.normal(kd, (B2, M2, N2), dtype=jnp.float32)
    loss2 = frobenius_loss(c, d)
    jax.block_until_ready(loss2)
    ref2 = jnp.mean(jnp.sum(jnp.abs(c - d) ** 2, axis=(1, 2)))
    assert jnp.allclose(loss2, ref2, rtol=1e-5, atol=1e-5), (loss2, ref2)

    # bf16 path (dtype-scaled tile rows, 16-row packing granule).
    e = a.astype(jnp.bfloat16)
    f = b.astype(jnp.bfloat16)
    loss3 = frobenius_loss(e, f)
    jax.block_until_ready(loss3)
    ref3 = jnp.mean(jnp.sum(jnp.abs(e.astype(jnp.float32) - f.astype(jnp.float32)) ** 2,
                            axis=(1, 2)))
    assert jnp.allclose(loss3, ref3, rtol=2e-2, atol=2e-2), (loss3, ref3)

    print("KERNEL_OK")
</pallas_src>

<mosaic_0001>
module attributes {stable_mosaic.version = 11 : i64} {
  func.func @kernel(%arg0: i32, %arg1: i32, %arg2: memref<8x128xf32, #tpu.memory_space<vmem>>, %arg3: memref<8x128xf32, #tpu.memory_space<vmem>>, %arg4: memref<8x128xf32, #tpu.memory_space<vmem>>) attributes {dimension_semantics = [#tpu.dimension_semantics<parallel>, #tpu.dimension_semantics<arbitrary>], iteration_bounds = array<i64: 1, 1>, scalar_prefetch = 0 : i64, scratch_operands = 0 : i64, tpu.core_type = #tpu.core_type<tc>, window_params = [{transform_indices = @transform_0, window_bounds = array<i64: 8, 128>}, {transform_indices = @transform_1, window_bounds = array<i64: 8, 128>}, {transform_indices = @transform_2, window_bounds = array<i64: 8, 128>}]} {
    %c0_i32 = arith.constant 0 : i32
    %0 = arith.cmpi eq, %arg1, %c0_i32 : i32
    %1 = arith.extui %0 : i1 to i32
    %c0_i32_0 = arith.constant 0 : i32
    %2 = arith.cmpi ne, %1, %c0_i32_0 : i32
    scf.if %2 {
      %cst_8 = arith.constant 0.000000e+00 : f32
      %18 = vector.broadcast %cst_8 : f32 to vector<8x128xf32>
      %c0_9 = arith.constant 0 : index
      %c0_10 = arith.constant 0 : index
      %19 = vector.load %arg4[%c0_9, %c0_10] : memref<8x128xf32, #tpu.memory_space<vmem>>, vector<8x128xf32>
      tpu.vector_store %arg4[%c0_9, %c0_10], %18 {strides = array<i32>} : memref<8x128xf32, #tpu.memory_space<vmem>>, vector<8x128xf32>,
    } else {
    }
    %cst = arith.constant 0.000000e+00 : f32
    %3 = vector.broadcast %cst : f32 to vector<8x128xf32>
    %c0_i32_1 = arith.constant 0 : i32
    %c8_i32 = arith.constant 8 : i32
    %4 = arith.muli %c0_i32_1, %c8_i32 : i32
    %5 = tpu.assume_multiple %4, 8 : i32
    %6 = arith.index_cast %5 : i32 to index
    %c0 = arith.constant 0 : index
    %7 = vector.load %arg2[%6, %c0] : memref<8x128xf32, #tpu.memory_space<vmem>>, vector<8x128xf32>
    %8 = arith.index_cast %5 : i32 to index
    %c0_2 = arith.constant 0 : index
    %9 = vector.load %arg3[%8, %c0_2] : memref<8x128xf32, #tpu.memory_space<vmem>>, vector<8x128xf32>
    %10 = arith.subf %7, %9 : vector<8x128xf32>
    %11 = arith.mulf %10, %10 : vector<8x128xf32>
    %12 = vector.shape_cast %11 : vector<8x128xf32> to vector<1x8x128xf32>
    %cst_3 = arith.constant dense<0.000000e+00> : vector<8x128xf32>
    %13 = vector.multi_reduction <add>, %12, %cst_3 [0] : vector<1x8x128xf32> to vector<8x128xf32>
    %14 = arith.addf %3, %13 : vector<8x128xf32>
    %c1_i32 = arith.constant 1 : i32
    %c0_4 = arith.constant 0 : index
    %c0_5 = arith.constant 0 : index
    %15 = vector.load %arg4[%c0_4, %c0_5] : memref<8x128xf32, #tpu.memory_space<vmem>>, vector<8x128xf32>
    %16 = arith.addf %15, %14 : vector<8x128xf32>
    %c0_6 = arith.constant 0 : index
    %c0_7 = arith.constant 0 : index
    %17 = vector.load %arg4[%c0_6, %c0_7] : memref<8x128xf32, #tpu.memory_space<vmem>>, vector<8x128xf32>
    tpu.vector_store %arg4[%c0_6, %c0_7], %16 {strides = array<i32>} : memref<8x128xf32, #tpu.memory_space<vmem>>, vector<8x128xf32>,
    return
  }
  func.func @transform_0(%arg0: i32, %arg1: i32) -> (i32, i32) {
    %c1_i32 = arith.constant 1 : i32
    %0 = arith.muli %arg0, %c1_i32 : i32
    %1 = arith.addi %0, %arg1 : i32
    %c0_i32 = arith.constant 0 : i32
    %2 = arith.minsi %1, %c0_i32 : i32
    %c0_i32_0 = arith.constant 0 : i32
    %c0_i32_1 = arith.constant 0 : i32
    return %2, %c0_i32_0 : i32, i32
  }
  func.func @transform_1(%arg0: i32, %arg1: i32) -> (i32, i32) {
    %c1_i32 = arith.constant 1 : i32
    %0 = arith.muli %arg0, %c1_i32 : i32
    %1 = arith.addi %0, %arg1 : i32
    %c0_i32 = arith.constant 0 : i32
    %2 = arith.minsi %1, %c0_i32 : i32
    %c0_i32_0 = arith.constant 0 : i32
    %c0_i32_1 = arith.constant 0 : i32
    return %2, %c0_i32_0 : i32, i32
  }
  func.func @transform_2(%arg0: i32, %arg1: i32) -> (i32, i32) {
    %c0_i32 = arith.constant 0 : i32
    %c0_i32_0 = arith.constant 0 : i32
    return %arg0, %c0_i32 : i32, i32
  }
}

</mosaic_0001>

<llo_original>
// kernel: tpu_custom_call.1
$region0: #{tpu_custom_call.1}
  #allocation0 [shape = 'u32[]', space=smem, size = 0x4, offset = 0x4, fixed_abs, tag = 'smem constant byte address 0x4 - core index']
  #allocation1 [shape = 'u32[144,128]{1,0:T(1,128)}', space=vmem, size = 0x12000, scoped, tag = 'internal scratch']
  %s0 = inlined_call_operand.hbm [shape: f32[8,128], index: 0, kind: input, shape index: {}]
  %s1 = inlined_call_operand.hbm [shape: f32[8,128], index: 1, kind: input, shape index: {}]
  %s2 = inlined_call_operand.hbm [shape: f32[8,128], index: 2, kind: output, shape index: {}]
  %s3 = sld [smem:[#allocation0]]
  $region30: #{tpu_custom_call.1} parent=0
    _
  %s5 = ssub.s32 1, %s3
  %s6 = scalar_select 0, %s5, %s3
  $region1: #{tpu_custom_call.1} parent=0
    #allocation2 [shape = 'u8[4096]{0}', space=vmem, size = 0x1000, scoped, tag = 'input window, operand 0, single buffered']
    #allocation3 [shape = 's32[1]{0}', space=sflag, size = 0x4, scoped, tag = 'scoped memory for tpu_custom_call.1']
    #allocation4 [shape = 's32[1]{0}', space=sflag, size = 0x4, scoped, tag = 'scoped memory for tpu_custom_call.1']
    #allocation5 [shape = 'u8[4096]{0}', space=vmem, size = 0x1000, scoped, tag = 'input window, operand 1, single buffered']
    #allocation6 [shape = 's32[1]{0}', space=sflag, size = 0x4, scoped, tag = 'scoped memory for tpu_custom_call.1']
    #allocation7 [shape = 'u8[4096]{0}', space=vmem, size = 0x1000, scoped, tag = 'output window, operand 0, single buffered']
    %7 = vsyncpa [#allocation3], 0
    %8 = vsyncpa [#allocation6], 0
    %9 = vsyncpa [#allocation4], 0
    // Predicated region
    $region2: #{tpu_custom_call.1} parent=1 // pred_check
      _
    $region3: #{tpu_custom_call.1} parent=1 // pred_check_branch
      %11 = sbr.rel (0) target = $region5
    $region4: #{tpu_custom_call.1} parent=1 // pred_region
      %s12 = sadd.s32 0, 0
      %p13 = scmp.lt.s32.totalorder %s12, 0
      %s14 = scalar_select %p13, %s12, 0
      %s16 = ssub.s32 128, 128
      %17 = vsyncadd [#allocation3], %s16
      %s18 = smul.addr %s14, 128
      %s19 = scalar_lea.hbm %s0, %s18
      %s21 = sshll.u32 [#allocation2], 4
      %s22 = int_to_ptr.vmem [resolvable:$true] %s21
      %24 = dma.hbm_to_vmem [thread:$0]  %s19, 128, %s22, [#allocation3]
    $region5: #{tpu_custom_call.1} parent=1 // pred_fallthru
      _
    // Predicated region
    $region6: #{tpu_custom_call.1} parent=1 // pred_check
      _
    $region7: #{tpu_custom_call.1} parent=1 // pred_check_branch
      %26 = sbr.rel (0) target = $region9
    $region8: #{tpu_custom_call.1} parent=1 // pred_region
      %s27 = sadd.s32 0, 0
      %p28 = scmp.lt.s32.totalorder %s27, 0
      %s29 = scalar_select %p28, %s27, 0
      %s31 = ssub.s32 128, 128
      %32 = vsyncadd [#allocation6], %s31
      %s33 = smul.addr %s29, 128
      %s34 = scalar_lea.hbm %s1, %s33
      %s36 = sshll.u32 [#allocation5], 4
      %s37 = int_to_ptr.vmem [resolvable:$true] %s36
      %39 = dma.hbm_to_vmem [thread:$0]  %s34, 128, %s37, [#allocation6]
    $region9: #{tpu_custom_call.1} parent=1 // pred_fallthru
      _
    // Predicated region
    $region10: #{tpu_custom_call.1} parent=1 // pred_check
      _
    $region11: #{tpu_custom_call.1} parent=1 // pred_check_branch
      %41 = sbr.rel (0) target = $region13
    $region12: #{tpu_custom_call.1} parent=1 // pred_region
      %42 = dma.done [#allocation3], 128
    $region13: #{tpu_custom_call.1} parent=1 // pred_fallthru
      _
    // Predicated region
    $region14: #{tpu_custom_call.1} parent=1 // pred_check
      _
    $region15: #{tpu_custom_call.1} parent=1 // pred_check_branch
      %44 = sbr.rel (0) target = $region17
    $region16: #{tpu_custom_call.1} parent=1 // pred_region
      %45 = dma.done [#allocation6], 128
    $region17: #{tpu_custom_call.1} parent=1 // pred_fallthru
      _
    %s46 = sadd.s32 0, 0
    %p47 = scmp.lt.s32.totalorder %s46, 0
    %s48 = scalar_select %p47, %s46, 0
    %s49 = sadd.s32 0, 0
    %p50 = scmp.lt.s32.totalorder %s49, 0
    %s51 = scalar_select %p50, %s49, 0
    %p52 = scmp.eq.s32.totalorder 0, 0
    // Predicated region
    $region18: #{tpu_custom_call.1} parent=1 // pred_check
      %p53 = pneg %p52
    $region19: #{tpu_custom_call.1} parent=1 // pred_check_branch
      %55 = sbr.rel (%p53) target = $region21
    $region20: #{tpu_custom_call.1} parent=1 // pred_region
      %56 = vst [vmem:[#allocation7] sm:$0xff] 0.0
    $region21: #{tpu_custom_call.1} parent=1 // pred_fallthru
      _
    %v57 = vld [vmem:[#allocation2] sm:$0xff]
    %v58 = vld [vmem:[#allocation5] sm:$0xff]
    %v59 = vsub.f32 %v57, %v58
    %v60 = vmul.f32 %v59, %v59
    %v61 = vadd.f32 %v60, 0.0
    %v62 = vadd.f32 %v61, 0.0
    %v63 = vld [vmem:[#allocation7] sm:$0xff]
    %v64 = vadd.f32 %v63, %v62
    %65 = vst [vmem:[#allocation7] sm:$0xff] %v64
    // Predicated region
    $region22: #{tpu_custom_call.1} parent=1 // pred_check
      _
    $region23: #{tpu_custom_call.1} parent=1 // pred_check_branch
      %67 = sbr.rel (0) target = $region25
    $region24: #{tpu_custom_call.1} parent=1 // pred_region
      %s69 = ssub.s32 128, 128
      %70 = vsyncadd [#allocation4], %s69
      %s72 = sshll.u32 [#allocation7], 4
      %s73 = int_to_ptr.vmem [resolvable:$true] %s72
      %75 = dma.vmem_to_hbm [thread:$0]  %s73, 128, %s2, [#allocation4]
    $region25: #{tpu_custom_call.1} parent=1 // pred_fallthru
      _
    // Predicated region
    $region26: #{tpu_custom_call.1} parent=1 // pred_check
      _
    $region27: #{tpu_custom_call.1} parent=1 // pred_check_branch
      %77 = sbr.rel (0) target = $region29
    $region28: #{tpu_custom_call.1} parent=1 // pred_region
      %78 = dma.done [#allocation4], 128
    $region29: #{tpu_custom_call.1} parent=1 // pred_fallthru
      _
    %79 = vsyncpa [#allocation3], 1
    %80 = vsyncpa [#allocation6], 1
    %81 = vsyncpa [#allocation4], 1

</llo_original>
